<compile_context>
chip_gen: v7x
topology: tpu7x:2x2x1
jax: 0.10.0
libtpu: 0.0.40
codegen_flags: <defaults>
</compile_context>

<pallas_src>
import functools

import jax
import jax.numpy as jnp
from jax.experimental import pallas as pl
from jax.experimental.pallas import tpu as pltpu


def _ru(n, m):
    """Round n up to a multiple of m."""
    return ((n + m - 1) // m) * m


def _cdiv(a, b):
    return -(-a // b)


@functools.lru_cache(maxsize=1)
def _device_kind():
    try:
        return jax.devices()[0].device_kind.lower()
    except Exception:  # pragma: no cover - defensive
        return ""


@functools.lru_cache(maxsize=1)
def _mxu_is_128_wide():
    # v5e and older have a 128x128-native MXU -> split the block-diagonal fc dots.
    kind = _device_kind()
    return any(tag in kind for tag in ("v2", "v3", "v4", "v5"))


@functools.lru_cache(maxsize=1)
def _is_v7x():
    kind = _device_kind()
    return ("v7" in kind) or ("7x" in kind)


# ----------------------------- Pallas kernel ------------------------------- #
def _dueling_heads_kernel(x_ref, wc_ref, w12_ref, w4_ref, b_ref, o_ref, *, split_fc):
    D = w12_ref.shape[1]
    half = D // 2
    out_w = o_ref.shape[1]

    # Layer 0: conv-equivalent (S -> D) + ReLU.  bf16 MXU operands, f32 accumulate.
    h = jnp.dot(x_ref[...].astype(jnp.bfloat16), wc_ref[...],
                preferred_element_type=jnp.float32)
    h = jnp.maximum(h + b_ref[0:1, :D], 0.0)

    # Layers 1/2: block-diagonal fc + ReLU.
    #  * v6e/v7x: one fused (TB,256)x(256,256) dot (256-wide MXU -> push-optimal).
    #  * v5-class: two native (TB,128)x(128,128) dots on the diagonal blocks, so no
    #    MXU pushes are spent multiplying the structural-zero off-diagonal blocks.
    for layer in range(2):
        hb = h.astype(jnp.bfloat16)
        if split_fc:
            lo = jnp.dot(hb[:, :half], w12_ref[layer, :half, :half],
                         preferred_element_type=jnp.float32)
            hi = jnp.dot(hb[:, half:], w12_ref[layer, half:, half:],
                         preferred_element_type=jnp.float32)
            h = jnp.concatenate([lo, hi], axis=1)
        else:
            h = jnp.dot(hb, w12_ref[layer], preferred_element_type=jnp.float32)
        h = jnp.maximum(h + b_ref[layer + 1:layer + 2, :D], 0.0)

    # Heads: columns [val | adv | 0...] of width out_pad (own slab -> no slicing).
    h = jnp.dot(h.astype(jnp.bfloat16), w4_ref[...],
                preferred_element_type=jnp.float32)
    o_ref[...] = h + b_ref[3:4, :out_w]


# ------------------------------ JAX wrapper -------------------------------- #
@functools.partial(jax.jit, static_argnames=("action_size",))
def dueling_forward(x, packed, action_size):
    B, S = x.shape
    D = packed["w12"].shape[1]
    out_pad = packed["w4"].shape[1]
    BW = packed["b"].shape[1]
    assert 1 + action_size <= out_pad

    # ---- batch-tile selection (perf items 1, 2, 7) --------------------------
    # TB_MAX=2048: ~4 KB/row of double-buffered x/out + intermediates -> ~8-9 MiB,
    # comfortably inside every generation's scoped VMEM (incl. v7x's 64 MiB phys).
    TB_MAX = 2048
    n_steps = max(1, _cdiv(B, TB_MAX))
    if _is_v7x():
        # >= 2 and even grid steps so the parallel batch axis shards over both TCs.
        n_steps = max(2, n_steps)
        n_steps += n_steps % 2
    TB = _ru(_cdiv(B, n_steps), 8)
    B_pad = TB * n_steps
    if B_pad != B:
        x = jnp.pad(x, ((0, B_pad - B), (0, 0)))

    # Advisory cost estimate (fused matmul flop count; zero transcendentals).
    flops = 2 * B_pad * (S * D + 2 * D * D + D * out_pad)
    bytes_accessed = (B_pad * S * 4 + B_pad * out_pad * 4
                      + packed["wc"].size * 2 + packed["w12"].size * 2
                      + packed["w4"].size * 2 + packed["b"].size * 4)

    kernel = functools.partial(_dueling_heads_kernel, split_fc=_mxu_is_128_wide())
    heads = pl.pallas_call(
        kernel,
        out_shape=jax.ShapeDtypeStruct((B_pad, out_pad), jnp.float32),
        grid=(n_steps,),
        in_specs=[
            pl.BlockSpec((TB, S), lambda i: (i, 0)),          # x: streamed per batch tile
            pl.BlockSpec((S, D), lambda i: (0, 0)),           # fused conv weight: resident
            pl.BlockSpec((2, D, D), lambda i: (0, 0, 0)),     # fc1/fc2 block-diag slab
            pl.BlockSpec((D, out_pad), lambda i: (0, 0)),     # heads weight slab
            pl.BlockSpec((4, BW), lambda i: (0, 0)),          # bias slab (f32)
        ],
        out_specs=pl.BlockSpec((TB, out_pad), lambda i: (i, 0)),
        compiler_params=pltpu.CompilerParams(
            dimension_semantics=("parallel",),
            vmem_limit_bytes=32 * 1024 * 1024),
        cost_estimate=pl.CostEstimate(
            flops=flops, transcendentals=0, bytes_accessed=bytes_accessed),
    )(x, packed["wc"], packed["w12"], packed["w4"], packed["b"])

    # Slice real rows BEFORE the mean: padded rows carry bias-propagated garbage.
    heads = heads[:B]
    val = heads[:, :1]
    adv = heads[:, 1:1 + action_size]
    # Global mean over (batch, actions), exactly like torch's adv.mean().
    return val + adv - jnp.mean(adv)


# ------------------------- Parameter construction -------------------------- #
def init_raw_params(key, state_size, action_size, node_size,
                    out_channels=5, hidsize1=128, hidsize2=128):
    """PyTorch-equivalent parameters: uniform(-1/sqrt(fan_in), 1/sqrt(fan_in))."""
    L = state_size // node_size
    F = out_channels * L

    def uniform(k, shape, fan_in):
        bound = 1.0 / float(fan_in) ** 0.5
        return jax.random.uniform(k, shape, jnp.float32, -bound, bound)

    ks = jax.random.split(key, 16)
    raw = {}
    for i, sfx in enumerate(("val", "adv")):
        off = 8 * i
        out_dim = 1 if sfx == "val" else action_size
        raw["wc_" + sfx] = uniform(ks[off + 0], (out_channels, node_size), node_size)
        raw["bc_" + sfx] = uniform(ks[off + 1], (out_channels,), node_size)
        raw["w1_" + sfx] = uniform(ks[off + 2], (F, hidsize1), F)
        raw["b1_" + sfx] = uniform(ks[off + 3], (hidsize1,), F)
        raw["w2_" + sfx] = uniform(ks[off + 4], (hidsize1, hidsize2), hidsize1)
        raw["b2_" + sfx] = uniform(ks[off + 5], (hidsize2,), hidsize1)
        raw["w4_" + sfx] = uniform(ks[off + 6], (hidsize2, out_dim), hidsize2)
        raw["b4_" + sfx] = uniform(ks[off + 7], (out_dim,), hidsize2)
    return raw


def pack_params(raw, state_size, action_size, node_size, out_channels,
                hidsize1=128, hidsize2=128):
    """Build the fused / padded / bf16 slabs the kernel consumes."""
    assert state_size % node_size == 0
    assert action_size >= 1
    L = state_size // node_size
    F = out_channels * L
    half = max(_ru(F, 128), _ru(hidsize1, 128), _ru(hidsize2, 128))  # per-stream width
    D = 2 * half
    out_pad = _ru(1 + action_size, 128)
    BW = max(D, out_pad)

    def conv_dense(wc, bc):
        # W_eq[l*K + k, c*L + l] = wc[c, k];  b_eq[c*L + l] = bc[c]
        eye = jnp.eye(L, dtype=jnp.float32)
        w_eq = jnp.einsum("ck,lm->lkcm", wc, eye).reshape(state_size, F)
        b_eq = jnp.repeat(bc, L)
        return w_eq, b_eq

    wcv, bcv = conv_dense(raw["wc_val"], raw["bc_val"])
    wca, bca = conv_dense(raw["wc_adv"], raw["bc_adv"])

    # Layer 0: conv-equivalent, value cols [0:F], adv cols [half:half+F].
    wc_f = jnp.zeros((state_size, D), jnp.float32)
    wc_f = wc_f.at[:, :F].set(wcv).at[:, half:half + F].set(wca)
    bc_f = jnp.zeros((D,), jnp.float32).at[:F].set(bcv).at[half:half + F].set(bca)

    # Layers 1/2: block-diagonal (value top-left, adv bottom-right). Padded
    # rows/cols are zero (and the matching bias lanes are zero) so no leakage.
    def blockdiag(wv, wa, r, c):
        w = jnp.zeros((D, D), jnp.float32)
        w = w.at[:r, :c].set(wv)
        w = w.at[half:half + r, half:half + c].set(wa)
        return w

    w1_f = blockdiag(raw["w1_val"], raw["w1_adv"], F, hidsize1)
    b1_f = (jnp.zeros((D,), jnp.float32)
            .at[:hidsize1].set(raw["b1_val"])
            .at[half:half + hidsize1].set(raw["b1_adv"]))
    w2_f = blockdiag(raw["w2_val"], raw["w2_adv"], hidsize1, hidsize2)
    b2_f = (jnp.zeros((D,), jnp.float32)
            .at[:hidsize2].set(raw["b2_val"])
            .at[half:half + hidsize2].set(raw["b2_adv"]))

    # Layer 3 (heads), own (D, out_pad) slab: col 0 = value, cols 1..A = advantage.
    w4_f = jnp.zeros((D, out_pad), jnp.float32)
    w4_f = w4_f.at[:hidsize2, 0:1].set(raw["w4_val"])
    w4_f = w4_f.at[half:half + hidsize2, 1:1 + action_size].set(raw["w4_adv"])
    b4_f = (jnp.zeros((out_pad,), jnp.float32)
            .at[0:1].set(raw["b4_val"])
            .at[1:1 + action_size].set(raw["b4_adv"]))

    # Bias slab (4, BW): rows 0-2 use the first D lanes, row 3 the first out_pad.
    b_slab = jnp.zeros((4, BW), jnp.float32)
    b_slab = b_slab.at[0, :D].set(bc_f).at[1, :D].set(b1_f).at[2, :D].set(b2_f)
    b_slab = b_slab.at[3, :out_pad].set(b4_f)

    packed = dict(
        wc=wc_f.astype(jnp.bfloat16),                      # (S, D)
        w12=jnp.stack([w1_f, w2_f]).astype(jnp.bfloat16),  # (2, D, D)
        w4=w4_f.astype(jnp.bfloat16),                      # (D, out_pad)
        b=b_slab,                                          # (4, BW) f32
    )
    return packed, dict(D=D, out_pad=out_pad)


# ------------------------ Pure-JAX reference (checks) ----------------------- #
def reference_forward(x, raw, node_size, action_size, matmul_dtype=jnp.float32):
    """Mirror of the torch module. matmul_dtype=bf16 matches the kernel's MXU
    precision; matmul_dtype=f32 matches the original module exactly."""
    B, S = x.shape
    K = node_size
    L = S // K

    def dot(a, w):
        return jnp.dot(a.astype(matmul_dtype), w.astype(matmul_dtype),
                       preferred_element_type=jnp.float32)

    def stream(sfx):
        xr = x.reshape(B, L, K)
        conv = jnp.einsum("blk,ck->bcl", xr.astype(matmul_dtype),
                          raw["wc_" + sfx].astype(matmul_dtype),
                          preferred_element_type=jnp.float32)
        conv = conv + raw["bc_" + sfx][None, :, None]
        h = jnp.maximum(conv, 0.0).reshape(B, -1)            # torch .view order (C*L)
        h = jnp.maximum(dot(h, raw["w1_" + sfx]) + raw["b1_" + sfx], 0.0)
        h = jnp.maximum(dot(h, raw["w2_" + sfx]) + raw["b2_" + sfx], 0.0)
        return dot(h, raw["w4_" + sfx]) + raw["b4_" + sfx]

    val = stream("val")                                      # (B, 1)
    adv = stream("adv")                                      # (B, A)
    return val + adv - jnp.mean(adv)


# ---------------------------------- main ------------------------------------ #
if __name__ == "__main__":
    batch = 2
    state_size = 64
    node_size = 8          # -> L = 8
    out_channels = 5       # -> conv_out_size = 40
    action_size = 5
    hidsize1 = hidsize2 = 128

    key = jax.random.PRNGKey(0)
    k_x, k_p = jax.random.split(key)
    x = jax.random.normal(k_x, (batch, state_size), jnp.float32)

    raw = init_raw_params(k_p, state_size, action_size, node_size,
                          out_channels, hidsize1, hidsize2)
    packed, _meta = pack_params(raw, state_size, action_size, node_size,
                                out_channels, hidsize1, hidsize2)

    out = dueling_forward(x, packed, action_size=action_size)
    out = jax.block_until_ready(out)
    assert out.shape == (batch, action_size)

    # Precision-matched reference (bf16 MXU operands, f32 accumulate — like the kernel).
    ref_bf16 = reference_forward(x, raw, node_size, action_size, jnp.bfloat16)
    assert jnp.allclose(out, ref_bf16, rtol=2e-3, atol=2e-3), (out, ref_bf16)

    # Full-f32 reference == original torch module numerics (loose tol for bf16 MXU).
    ref_f32 = reference_forward(x, raw, node_size, action_size, jnp.float32)
    assert jnp.allclose(out, ref_f32, rtol=5e-2, atol=5e-2), (out, ref_f32)

    print("KERNEL_OK")
</pallas_src>

<mosaic_0001>
module attributes {stable_mosaic.version = 11 : i64} {
  func.func @_dueling_heads_kernel(%arg0: i32, %arg1: memref<8x64xf32, #tpu.memory_space<vmem>>, %arg2: memref<64x256xbf16, #tpu.memory_space<vmem>>, %arg3: memref<2x256x256xbf16, #tpu.memory_space<vmem>>, %arg4: memref<256x128xbf16, #tpu.memory_space<vmem>>, %arg5: memref<4x256xf32, #tpu.memory_space<vmem>>, %arg6: memref<8x128xf32, #tpu.memory_space<vmem>>) attributes {dimension_semantics = [#tpu.dimension_semantics<parallel>], iteration_bounds = array<i64: 1>, scalar_prefetch = 0 : i64, scratch_operands = 0 : i64, tpu.core_type = #tpu.core_type<tc>, window_params = [{transform_indices = @transform_0, window_bounds = array<i64: 8, 64>}, {pipeline_mode = #tpu.pipeline_mode<synchronous>, transform_indices = @transform_1, window_bounds = array<i64: 64, 256>}, {pipeline_mode = #tpu.pipeline_mode<synchronous>, transform_indices = @transform_2, window_bounds = array<i64: 2, 256, 256>}, {pipeline_mode = #tpu.pipeline_mode<synchronous>, transform_indices = @transform_3, window_bounds = array<i64: 256, 128>}, {pipeline_mode = #tpu.pipeline_mode<synchronous>, transform_indices = @transform_4, window_bounds = array<i64: 4, 256>}, {transform_indices = @transform_5, window_bounds = array<i64: 8, 128>}]} {
    %c0 = arith.constant 0 : index
    %c0_0 = arith.constant 0 : index
    %0 = vector.load %arg1[%c0, %c0_0] : memref<8x64xf32, #tpu.memory_space<vmem>>, vector<8x64xf32>
    %1 = arith.truncf %0 : vector<8x64xf32> to vector<8x64xbf16>
    %c0_1 = arith.constant 0 : index
    %c0_2 = arith.constant 0 : index
    %2 = vector.load %arg2[%c0_1, %c0_2] : memref<64x256xbf16, #tpu.memory_space<vmem>>, vector<64x256xbf16>
    %cst = arith.constant dense<0.000000e+00> : vector<8x256xf32>
    %3 = tpu.matmul %1, %2, %cst {dimension_numbers = #tpu.dot_dimension_numbers<[1], [0], [0], [1], [0, 0, 1, 1], [], []>} : vector<8x64xbf16>, vector<64x256xbf16>, vector<8x256xf32> -> vector<8x256xf32>
    %c0_3 = arith.constant 0 : index
    %c0_4 = arith.constant 0 : index
    %4 = vector.load %arg5[%c0_3, %c0_4] : memref<4x256xf32, #tpu.memory_space<vmem>>, vector<1x256xf32>
    %5 = vector.broadcast %4 : vector<1x256xf32> to vector<8x256xf32>
    %6 = arith.addf %3, %5 : vector<8x256xf32>
    %cst_5 = arith.constant 0.000000e+00 : f32
    %7 = vector.broadcast %cst_5 : f32 to vector<8x256xf32>
    %8 = arith.maximumf %6, %7 : vector<8x256xf32>
    %9 = arith.truncf %8 : vector<8x256xf32> to vector<8x256xbf16>
    %c0_6 = arith.constant 0 : index
    %c0_7 = arith.constant 0 : index
    %c0_8 = arith.constant 0 : index
    %10 = vector.load %arg3[%c0_6, %c0_7, %c0_8] : memref<2x256x256xbf16, #tpu.memory_space<vmem>>, vector<1x256x256xbf16>
    %11 = vector.shape_cast %10 : vector<1x256x256xbf16> to vector<256x256xbf16>
    %cst_9 = arith.constant dense<0.000000e+00> : vector<8x256xf32>
    %12 = tpu.matmul %9, %11, %cst_9 {dimension_numbers = #tpu.dot_dimension_numbers<[1], [0], [0], [1], [0, 0, 1, 1], [], []>} : vector<8x256xbf16>, vector<256x256xbf16>, vector<8x256xf32> -> vector<8x256xf32>
    %c1 = arith.constant 1 : index
    %c0_10 = arith.constant 0 : index
    %13 = vector.load %arg5[%c1, %c0_10] : memref<4x256xf32, #tpu.memory_space<vmem>>, vector<1x256xf32>
    %14 = vector.broadcast %13 : vector<1x256xf32> to vector<8x256xf32>
    %15 = arith.addf %12, %14 : vector<8x256xf32>
    %cst_11 = arith.constant 0.000000e+00 : f32
    %16 = vector.broadcast %cst_11 : f32 to vector<8x256xf32>
    %17 = arith.maximumf %15, %16 : vector<8x256xf32>
    %18 = arith.truncf %17 : vector<8x256xf32> to vector<8x256xbf16>
    %c1_12 = arith.constant 1 : index
    %c0_13 = arith.constant 0 : index
    %c0_14 = arith.constant 0 : index
    %19 = vector.load %arg3[%c1_12, %c0_13, %c0_14] : memref<2x256x256xbf16, #tpu.memory_space<vmem>>, vector<1x256x256xbf16>
    %20 = vector.shape_cast %19 : vector<1x256x256xbf16> to vector<256x256xbf16>
    %cst_15 = arith.constant dense<0.000000e+00> : vector<8x256xf32>
    %21 = tpu.matmul %18, %20, %cst_15 {dimension_numbers = #tpu.dot_dimension_numbers<[1], [0], [0], [1], [0, 0, 1, 1], [], []>} : vector<8x256xbf16>, vector<256x256xbf16>, vector<8x256xf32> -> vector<8x256xf32>
    %c2 = arith.constant 2 : index
    %c0_16 = arith.constant 0 : index
    %22 = vector.load %arg5[%c2, %c0_16] : memref<4x256xf32, #tpu.memory_space<vmem>>, vector<1x256xf32>
    %23 = vector.broadcast %22 : vector<1x256xf32> to vector<8x256xf32>
    %24 = arith.addf %21, %23 : vector<8x256xf32>
    %cst_17 = arith.constant 0.000000e+00 : f32
    %25 = vector.broadcast %cst_17 : f32 to vector<8x256xf32>
    %26 = arith.maximumf %24, %25 : vector<8x256xf32>
    %27 = arith.truncf %26 : vector<8x256xf32> to vector<8x256xbf16>
    %c0_18 = arith.constant 0 : index
    %c0_19 = arith.constant 0 : index
    %28 = vector.load %arg4[%c0_18, %c0_19] : memref<256x128xbf16, #tpu.memory_space<vmem>>, vector<256x128xbf16>
    %cst_20 = arith.constant dense<0.000000e+00> : vector<8x128xf32>
    %29 = tpu.matmul %27, %28, %cst_20 {dimension_numbers = #tpu.dot_dimension_numbers<[1], [0], [0], [1], [0, 0, 1, 1], [], []>} : vector<8x256xbf16>, vector<256x128xbf16>, vector<8x128xf32> -> vector<8x128xf32>
    %c3 = arith.constant 3 : index
    %c0_21 = arith.constant 0 : index
    %30 = vector.load %arg5[%c3, %c0_21] : memref<4x256xf32, #tpu.memory_space<vmem>>, vector<1x128xf32>
    %31 = vector.broadcast %30 : vector<1x128xf32> to vector<8x128xf32>
    %32 = arith.addf %29, %31 : vector<8x128xf32>
    %c0_22 = arith.constant 0 : index
    %c0_23 = arith.constant 0 : index
    %33 = vector.load %arg6[%c0_22, %c0_23] : memref<8x128xf32, #tpu.memory_space<vmem>>, vector<8x128xf32>
    tpu.vector_store %arg6[%c0_22, %c0_23], %32 {strides = array<i32>} : memref<8x128xf32, #tpu.memory_space<vmem>>, vector<8x128xf32>,
    return
  }
  func.func @transform_0(%arg0: i32) -> (i32, i32) {
    %c0_i32 = arith.constant 0 : i32
    %c0_i32_0 = arith.constant 0 : i32
    return %arg0, %c0_i32 : i32, i32
  }
  func.func @transform_1(%arg0: i32) -> (i32, i32) {
    %c0_i32 = arith.constant 0 : i32
    %c0_i32_0 = arith.constant 0 : i32
    %c0_i32_1 = arith.constant 0 : i32
    return %c0_i32, %c0_i32_0 : i32, i32
  }
  func.func @transform_2(%arg0: i32) -> (i32, i32, i32) {
    %c0_i32 = arith.constant 0 : i32
    %c0_i32_0 = arith.constant 0 : i32
    %c0_i32_1 = arith.constant 0 : i32
    %c0_i32_2 = arith.constant 0 : i32
    return %c0_i32, %c0_i32_0, %c0_i32_1 : i32, i32, i32
  }
  func.func @transform_3(%arg0: i32) -> (i32, i32) {
    %c0_i32 = arith.constant 0 : i32
    %c0_i32_0 = arith.constant 0 : i32
    %c0_i32_1 = arith.constant 0 : i32
    return %c0_i32, %c0_i32_0 : i32, i32
  }
  func.func @transform_4(%arg0: i32) -> (i32, i32) {
    %c0_i32 = arith.constant 0 : i32
    %c0_i32_0 = arith.constant 0 : i32
    %c0_i32_1 = arith.constant 0 : i32
    return %c0_i32, %c0_i32_0 : i32, i32
  }
  func.func @transform_5(%arg0: i32) -> (i32, i32) {
    %c0_i32 = arith.constant 0 : i32
    %c0_i32_0 = arith.constant 0 : i32
    return %arg0, %c0_i32 : i32, i32
  }
}

</mosaic_0001>

<llo_original>
// kernel: dueling_forward.1
$region0: #{dueling_forward.1}
  #allocation0 [shape = 'u32[]', space=smem, size = 0x4, offset = 0x4, fixed_abs, tag = 'smem constant byte address 0x4 - core index']
  #allocation1 [shape = 'u32[144,128]{1,0:T(1,128)}', space=vmem, size = 0x12000, scoped, tag = 'internal scratch']
  %s0 = inlined_call_operand.vmem [shape: f32[8,64], index: 0, kind: input, shape index: {}]
  %s1 = inlined_call_operand.hbm [shape: bf16[64,256], index: 1, kind: input, shape index: {}]
  %s2 = inlined_call_operand.hbm [shape: bf16[2,256,256], index: 2, kind: input, shape index: {}]
  %s3 = inlined_call_operand.hbm [shape: bf16[256,128], index: 3, kind: input, shape index: {}]
  %s4 = inlined_call_operand.vmem [shape: f32[4,256], index: 4, kind: input, shape index: {}]
  %s5 = inlined_call_operand.vmem [shape: f32[8,128], index: 5, kind: output, shape index: {}]
  %s6 = sld [smem:[#allocation0]]
  $region42: #{dueling_forward.1} parent=0
    _
  %s8 = ssub.s32 1, %s6
  %s9 = scalar_select 0, %s8, %s6
  $region1: #{dueling_forward.1} parent=0
    #allocation2 [shape = 'u8[32768]{0}', space=vmem, size = 0x8000, scoped, tag = 'input window, operand 1, single buffered']
    #allocation3 [shape = 's32[1]{0}', space=sflag, size = 0x4, scoped, tag = 'scoped memory for dueling_forward.1']
    #allocation4 [shape = 'u8[262144]{0}', space=vmem, size = 0x40000, scoped, tag = 'input window, operand 2, single buffered']
    #allocation5 [shape = 's32[1]{0}', space=sflag, size = 0x4, scoped, tag = 'scoped memory for dueling_forward.1']
    #allocation6 [shape = 'u8[65536]{0}', space=vmem, size = 0x10000, scoped, tag = 'input window, operand 3, single buffered']
    %10 = vsyncpa [#allocation3], 0
    %11 = vsyncpa [#allocation5], 0
    // Predicated region
    $region2: #{dueling_forward.1} parent=1 // pred_check
      _
    $region3: #{dueling_forward.1} parent=1 // pred_check_branch
      %13 = sbr.rel (0) target = $region5
    $region4: #{dueling_forward.1} parent=1 // pred_region
      _
    $region5: #{dueling_forward.1} parent=1 // pred_fallthru
      _
    // Predicated region
    $region6: #{dueling_forward.1} parent=1 // pred_check
      _
    $region7: #{dueling_forward.1} parent=1 // pred_check_branch
      %15 = sbr.rel (0) target = $region9
    $region8: #{dueling_forward.1} parent=1 // pred_region
      %s17 = ssub.s32 1024, 1024
      %18 = vsyncadd [#allocation3], %s17
      %s19 = sshll.u32 [#allocation2], 4
      %s20 = int_to_ptr.vmem [resolvable:$true] %s19
      %25 = dma.hbm_to_vmem [thread:$0]  %s1, 1024, %s20, [#allocation3], 128, 128, 8
    $region9: #{dueling_forward.1} parent=1 // pred_fallthru
      _
    // Predicated region
    $region10: #{dueling_forward.1} parent=1 // pred_check
      _
    $region11: #{dueling_forward.1} parent=1 // pred_check_branch
      %27 = sbr.rel (0) target = $region13
    $region12: #{dueling_forward.1} parent=1 // pred_region
      %s29 = ssub.s32 8192, 8192
      %30 = vsyncadd [#allocation5], %s29
      %s31 = sshll.u32 [#allocation4], 4
      %s32 = int_to_ptr.vmem [resolvable:$true] %s31
      %37 = dma.hbm_to_vmem [thread:$0]  %s2, 8192, %s32, [#allocation5], 128, 128, 8
    $region13: #{dueling_forward.1} parent=1 // pred_fallthru
      _
    // Predicated region
    $region14: #{dueling_forward.1} parent=1 // pred_check
      _
    $region15: #{dueling_forward.1} parent=1 // pred_check_branch
      %39 = sbr.rel (0) target = $region17
    $region16: #{dueling_forward.1} parent=1 // pred_region
      %s41 = ssub.s32 2048, 2048
      %42 = vsyncadd [#allocation5], %s41
      %s43 = sshll.u32 [#allocation6], 4
      %s44 = int_to_ptr.vmem [resolvable:$true] %s43
      %49 = dma.hbm_to_vmem [thread:$0]  %s3, 2048, %s44, [#allocation5], 64, 64, 4
    $region17: #{dueling_forward.1} parent=1 // pred_fallthru
      _
    // Predicated region
    $region18: #{dueling_forward.1} parent=1 // pred_check
      _
    $region19: #{dueling_forward.1} parent=1 // pred_check_branch
      %51 = sbr.rel (0) target = $region21
    $region20: #{dueling_forward.1} parent=1 // pred_region
      _
    $region21: #{dueling_forward.1} parent=1 // pred_fallthru
      _
    // Predicated region
    $region22: #{dueling_forward.1} parent=1 // pred_check
      _
    $region23: #{dueling_forward.1} parent=1 // pred_check_branch
      %53 = sbr.rel (0) target = $region25
    $region24: #{dueling_forward.1} parent=1 // pred_region
      %54 = dma.done [#allocation3], 1024
    $region25: #{dueling_forward.1} parent=1 // pred_fallthru
      _
    // Predicated region
    $region26: #{dueling_forward.1} parent=1 // pred_check
      _
    $region27: #{dueling_forward.1} parent=1 // pred_check_branch
      %56 = sbr.rel (0) target = $region29
    $region28: #{dueling_forward.1} parent=1 // pred_region
      %57 = dma.done [#allocation5], 8192
    $region29: #{dueling_forward.1} parent=1 // pred_fallthru
      _
    // Predicated region
    $region30: #{dueling_forward.1} parent=1 // pred_check
      _
    $region31: #{dueling_forward.1} parent=1 // pred_check_branch
      %59 = sbr.rel (0) target = $region33
    $region32: #{dueling_forward.1} parent=1 // pred_region
      %60 = dma.done [#allocation5], 2048
    $region33: #{dueling_forward.1} parent=1 // pred_fallthru
      _
    %v62 = vld [vmem:[%s0] sm:$0xff]
    %v63 = vpack.c.bf16 %v62, %v62
    %v64 = vld [vmem:[#allocation2] sm:$0xff]
    %v65 = vld [vmem:[#allocation2 + $0x8] sm:$0xff]
    %v66 = vld [vmem:[#allocation2 + $0x10] sm:$0xff]
    %v67 = vld [vmem:[#allocation2 + $0x18] sm:$0xff]
    %v68 = vld [vmem:[#allocation2 + $0x20] sm:$0xff]
    %v69 = vld [vmem:[#allocation2 + $0x28] sm:$0xff]
    %v70 = vld [vmem:[#allocation2 + $0x30] sm:$0xff]
    %v71 = vld [vmem:[#allocation2 + $0x38] sm:$0xff]
    %v72 = vld [vmem:[%s4] ss:$4 sm:$0x3]
    %v74 = vlaneseq
    %v75 = vshrl.u32 %v74, 7
    %v76 = vsub.s32 0, %v75
    %v77 = vrot.slane %v72, %v76
    %v78 = vlaneseq
    %v79 = vshrl.u32 %v78, 7
    %v80 = vsub.s32 1, %v79
    %v81 = vrot.slane %v72, %v80
    %v92 = vunpack.c.l.b16 %v64
    %v93 = vunpack.c.h.b16 %v64
    %v94 = vunpack.c.l.b16 %v65
    %v95 = vunpack.c.h.b16 %v65
    %v96 = vunpack.c.l.b16 %v66
    %v97 = vunpack.c.h.b16 %v66
    %v98 = vunpack.c.l.b16 %v67
    %v99 = vunpack.c.h.b16 %v67
    %v100 = vunpack.c.l.b16 %v68
    %v101 = vunpack.c.h.b16 %v68
    %v102 = vunpack.c.l.b16 %v69
    %v103 = vunpack.c.h.b16 %v69
    %v104 = vunpack.c.l.b16 %v70
    %v105 = vunpack.c.h.b16 %v70
    %v106 = vunpack.c.l.b16 %v71
    %v107 = vunpack.c.h.b16 %v71
    %v108 = vpack.c.b16 %v94, %v92
    %v109 = vpack.c.b16 %v95, %v93
    %v110 = vpack.c.b16 %v98, %v96
    %v111 = vpack.c.b16 %v99, %v97
    %v112 = vpack.c.b16 %v102, %v100
    %v113 = vpack.c.b16 %v103, %v101
    %v114 = vpack.c.b16 %v106, %v104
    %v115 = vpack.c.b16 %v107, %v105
    %vm124 = vcmask 523264
    %v126 = vsel %vm124, %v63, 0
    %128 = vmatprep.subr.bf16.mxu0 %v109
    %129 = vmatpush1.bf16.msra.mxu0 %v108
    %130 = vmatprep.subr.bf16.mxu0 %v111
    %131 = vmatpush1.bf16.msra.mxu0 %v110
    %132 = vmatprep.subr.bf16.mxu0 %v113
    %133 = vmatpush1.bf16.msra.mxu0 %v112
    %134 = vmatprep.subr.bf16.mxu0 %v115
    %135 = vmatpush1.bf16.msra.mxu0 %v114
    %136 = vmatprep.subr.bf16.mxu0 0
    %137 = vmatpush1.bf16.msra.mxu0 0
    %138 = vmatprep.subr.bf16.mxu0 0
    %139 = vmatpush1.bf16.msra.mxu0 0
    %140 = vmatprep.subr.bf16.mxu0 0
    %141 = vmatpush1.bf16.msra.mxu0 0
    %142 = vmatprep.subr.bf16.mxu0 0
    %143 = vmatpush1.bf16.msra.mxu0 0
    %144 = vmatprep.subr.bf16.mxu0 0
    %145 = vmatpush1.bf16.msra.mxu0 0
    %146 = vmatprep.subr.bf16.mxu0 0
    %147 = vmatpush1.bf16.msra.mxu0 0
    %148 = vmatprep.subr.bf16.mxu0 0
    %149 = vmatpush1.bf16.msra.mxu0 0
    %150 = vmatprep.subr.bf16.mxu0 0
    %151 = vmatpush1.bf16.msra.mxu0 0
    %152 = vmatprep.subr.bf16.mxu0 0
    %153 = vmatpush1.bf16.msra.mxu0 0
    %154 = vmatprep.subr.bf16.mxu0 0
    %155 = vmatpush1.bf16.msra.mxu0 0
    %156 = vmatprep.subr.bf16.mxu0 0
    %157 = vmatpush1.bf16.msra.mxu0 0
    %158 = vmatprep.subr.bf16.mxu0 0
    %159 = vmatpush1.bf16.msra.mxu0 0
    %160 = vmatprep.mubr.bf16.mxu0 0
    %161 = vmatmul.mubr.bf16.gmra.mrb[0].mxu0 %v126
    %v162 = vpop.f32.mrb[0].mxu0
    %v163 = vadd.f32 %v77, %v162
    %v164 = vpop.f32.mrb[0].mxu0
    %v165 = vadd.f32 %v81, %v164
    %v166 = vpop.f32.mrb[0].mxu0
    %v167 = vpop.f32.mrb[0].mxu0
    %168 = vdwg.mxu0
    %v169 = vmax.f32 %v163, 0.0
    %v170 = vmax.f32 %v165, 0.0
    %v171 = vpack.c.bf16 %v169, %v169
    %v172 = vpack.c.bf16 %v170, %v170
    %v173 = vld [vmem:[#allocation4] sm:$0xff]
    %v174 = vld [vmem:[#allocation4 + $0x8] sm:$0xff]
    %v175 = vld [vmem:[#allocation4 + $0x10] sm:$0xff]
    %v176 = vld [vmem:[#allocation4 + $0x18] sm:$0xff]
    %v177 = vld [vmem:[#allocation4 + $0x20] sm:$0xff]
    %v178 = vld [vmem:[#allocation4 + $0x28] sm:$0xff]
    %v179 = vld [vmem:[#allocation4 + $0x30] sm:$0xff]
    %v180 = vld [vmem:[#allocation4 + $0x38] sm:$0xff]
    %v181 = vld [vmem:[#allocation4 + $0x40] sm:$0xff]
    %v182 = vld [vmem:[#allocation4 + $0x48] sm:$0xff]
    %v183 = vld [vmem:[#allocation4 + $0x50] sm:$0xff]
    %v184 = vld [vmem:[#allocation4 + $0x58] sm:$0xff]
    %v185 = vld [vmem:[#allocation4 + $0x60] sm:$0xff]
    %v186 = vld [vmem:[#allocation4 + $0x68] sm:$0xff]
    %v187 = vld [vmem:[#allocation4 + $0x70] sm:$0xff]
    %v188 = vld [vmem:[#allocation4 + $0x78] sm:$0xff]
    %v189 = vld [vmem:[#allocation4 + $0x80] sm:$0xff]
    %v190 = vld [vmem:[#allocation4 + $0x88] sm:$0xff]
    %v191 = vld [vmem:[#allocation4 + $0x90] sm:$0xff]
    %v192 = vld [vmem:[#allocation4 + $0x98] sm:$0xff]
    %v193 = vld [vmem:[#allocation4 + $0xa0] sm:$0xff]
    %v194 = vld [vmem:[#allocation4 + $0xa8] sm:$0xff]
    %v195 = vld [vmem:[#allocation4 + $0xb0] sm:$0xff]
    %v196 = vld [vmem:[#allocation4 + $0xb8] sm:$0xff]
    %v197 = vld [vmem:[#allocation4 + $0xc0] sm:$0xff]
    %v198 = vld [vmem:[#allocation4 + $0xc8] sm:$0xff]
    %v199 = vld [vmem:[#allocation4 + $0xd0] sm:$0xff]
    %v200 = vld [vmem:[#allocation4 + $0xd8] sm:$0xff]
    %v201 = vld [vmem:[#allocation4 + $0xe0] sm:$0xff]
    %v202 = vld [vmem:[#allocation4 + $0xe8] sm:$0xff]
    %v203 = vld [vmem:[#allocation4 + $0xf0] sm:$0xff]
    %v204 = vld [vmem:[#allocation4 + $0xf8] sm:$0xff]
    %s205 = scalar_lea.vmem %s4, 1
    %v206 = vld [vmem:[%s205] ss:$4 sm:$0x3]
    %v208 = vlaneseq
    %v209 = vshrl.u32 %v208, 7
    %v210 = vsub.s32 0, %v209
    %v211 = vrot.slane %v206, %v210
    %v212 = vlaneseq
    %v213 = vshrl.u32 %v212, 7
    %v214 = vsub.s32 1, %v213
    %v215 = vrot.slane %v206, %v214
    %v250 = vunpack.c.l.b16 %v173
    %v251 = vunpack.c.h.b16 %v173
    %v252 = vunpack.c.l.b16 %v174
    %v253 = vunpack.c.h.b16 %v174
    %v254 = vunpack.c.l.b16 %v175
    %v255 = vunpack.c.h.b16 %v175
    %v256 = vunpack.c.l.b16 %v176
    %v257 = vunpack.c.h.b16 %v176
    %v258 = vunpack.c.l.b16 %v177
    %v259 = vunpack.c.h.b16 %v177
    %v260 = vunpack.c.l.b16 %v178
    %v261 = vunpack.c.h.b16 %v178
    %v262 = vunpack.c.l.b16 %v179
    %v263 = vunpack.c.h.b16 %v179
    %v264 = vunpack.c.l.b16 %v180
    %v265 = vunpack.c.h.b16 %v180
    %v266 = vunpack.c.l.b16 %v181
    %v267 = vunpack.c.h.b16 %v181
    %v268 = vunpack.c.l.b16 %v182
    %v269 = vunpack.c.h.b16 %v182
    %v270 = vunpack.c.l.b16 %v183
    %v271 = vunpack.c.h.b16 %v183
    %v272 = vunpack.c.l.b16 %v184
    %v273 = vunpack.c.h.b16 %v184
    %v274 = vunpack.c.l.b16 %v185
    %v275 = vunpack.c.h.b16 %v185
    %v276 = vunpack.c.l.b16 %v186
    %v277 = vunpack.c.h.b16 %v186
    %v278 = vunpack.c.l.b16 %v187
    %v279 = vunpack.c.h.b16 %v187
    %v280 = vunpack.c.l.b16 %v188
    %v281 = vunpack.c.h.b16 %v188
    %v282 = vunpack.c.l.b16 %v189
    %v283 = vunpack.c.h.b16 %v189
    %v284 = vunpack.c.l.b16 %v190
    %v285 = vunpack.c.h.b16 %v190
    %v286 = vunpack.c.l.b16 %v191
    %v287 = vunpack.c.h.b16 %v191
    %v288 = vunpack.c.l.b16 %v192
    %v289 = vunpack.c.h.b16 %v192
    %v290 = vunpack.c.l.b16 %v193
    %v291 = vunpack.c.h.b16 %v193
    %v292 = vunpack.c.l.b16 %v194
    %v293 = vunpack.c.h.b16 %v194
    %v294 = vunpack.c.l.b16 %v195
    %v295 = vunpack.c.h.b16 %v195
    %v296 = vunpack.c.l.b16 %v196
    %v297 = vunpack.c.h.b16 %v196
    %v298 = vunpack.c.l.b16 %v197
    %v299 = vunpack.c.h.b16 %v197
    %v300 = vunpack.c.l.b16 %v198
    %v301 = vunpack.c.h.b16 %v198
    %v302 = vunpack.c.l.b16 %v199
    %v303 = vunpack.c.h.b16 %v199
    %v304 = vunpack.c.l.b16 %v200
    %v305 = vunpack.c.h.b16 %v200
    %v306 = vunpack.c.l.b16 %v201
    %v307 = vunpack.c.h.b16 %v201
    %v308 = vunpack.c.l.b16 %v202
    %v309 = vunpack.c.h.b16 %v202
    %v310 = vunpack.c.l.b16 %v203
    %v311 = vunpack.c.h.b16 %v203
    %v312 = vunpack.c.l.b16 %v204
    %v313 = vunpack.c.h.b16 %v204
    %v314 = vpack.c.b16 %v252, %v250
    %v315 = vpack.c.b16 %v253, %v251
    %v316 = vpack.c.b16 %v256, %v254
    %v317 = vpack.c.b16 %v257, %v255
    %v318 = vpack.c.b16 %v260, %v258
    %v319 = vpack.c.b16 %v261, %v259
    %v320 = vpack.c.b16 %v264, %v262
    %v321 = vpack.c.b16 %v265, %v263
    %v322 = vpack.c.b16 %v268, %v266
    %v323 = vpack.c.b16 %v269, %v267
    %v324 = vpack.c.b16 %v272, %v270
    %v325 = vpack.c.b16 %v273, %v271
    %v326 = vpack.c.b16 %v276, %v274
    %v327 = vpack.c.b16 %v277, %v275
    %v328 = vpack.c.b16 %v280, %v278
    %v329 = vpack.c.b16 %v281, %v279
    %v330 = vpack.c.b16 %v284, %v282
    %v331 = vpack.c.b16 %v285, %v283
    %v332 = vpack.c.b16 %v288, %v286
    %v333 = vpack.c.b16 %v289, %v287
    %v334 = vpack.c.b16 %v292, %v290
    %v335 = vpack.c.b16 %v293, %v291
    %v336 = vpack.c.b16 %v296, %v294
    %v337 = vpack.c.b16 %v297, %v295
    %v338 = vpack.c.b16 %v300, %v298
    %v339 = vpack.c.b16 %v301, %v299
    %v340 = vpack.c.b16 %v304, %v302
    %v341 = vpack.c.b16 %v305, %v303
    %v342 = vpack.c.b16 %v308, %v306
    %v343 = vpack.c.b16 %v309, %v307
    %v344 = vpack.c.b16 %v312, %v310
    %v345 = vpack.c.b16 %v313, %v311
    %378 = vmatprep.subr.bf16.mxu0 %v315
    %379 = vmatpush1.bf16.msra.mxu0 %v314
    %380 = vmatprep.subr.bf16.mxu0 %v317
    %381 = vmatpush1.bf16.msra.mxu0 %v316
    %382 = vmatprep.subr.bf16.mxu0 %v319
    %383 = vmatpush1.bf16.msra.mxu0 %v318
    %384 = vmatprep.subr.bf16.mxu0 %v321
    %385 = vmatpush1.bf16.msra.mxu0 %v320
    %386 = vmatprep.subr.bf16.mxu0 %v323
    %387 = vmatpush1.bf16.msra.mxu0 %v322
    %388 = vmatprep.subr.bf16.mxu0 %v325
    %389 = vmatpush1.bf16.msra.mxu0 %v324
    %390 = vmatprep.subr.bf16.mxu0 %v327
    %391 = vmatpush1.bf16.msra.mxu0 %v326
    %392 = vmatprep.subr.bf16.mxu0 %v329
    %393 = vmatpush1.bf16.msra.mxu0 %v328
    %394 = vmatprep.subr.bf16.mxu0 %v331
    %395 = vmatpush1.bf16.msra.mxu0 %v330
    %396 = vmatprep.subr.bf16.mxu0 %v333
    %397 = vmatpush1.bf16.msra.mxu0 %v332
    %398 = vmatprep.subr.bf16.mxu0 %v335
    %399 = vmatpush1.bf16.msra.mxu0 %v334
    %400 = vmatprep.subr.bf16.mxu0 %v337
    %401 = vmatpush1.bf16.msra.mxu0 %v336
    %402 = vmatprep.subr.bf16.mxu0 %v339
    %403 = vmatpush1.bf16.msra.mxu0 %v338
    %404 = vmatprep.subr.bf16.mxu0 %v341
    %405 = vmatpush1.bf16.msra.mxu0 %v340
    %406 = vmatprep.subr.bf16.mxu0 %v343
    %407 = vmatpush1.bf16.msra.mxu0 %v342
    %408 = vmatprep.subr.bf16.mxu0 %v345
    %409 = vmatpush1.bf16.msra.mxu0 %v344
    %410 = vmatprep.mubr.bf16.mxu0 %v172
    %411 = vmatmul.mubr.bf16.gmra.mrb[0].mxu0 %v171
    %v412 = vpop.f32.mrb[0].mxu0
    %v413 = vadd.f32 %v211, %v412
    %v414 = vpop.f32.mrb[0].mxu0
    %v415 = vadd.f32 %v215, %v414
    %v416 = vpop.f32.mrb[0].mxu0
    %v417 = vpop.f32.mrb[0].mxu0
    %418 = vdwg.mxu0
    %v419 = vmax.f32 %v413, 0.0
    %v420 = vmax.f32 %v415, 0.0
    %v421 = vpack.c.bf16 %v419, %v419
    %v422 = vpack.c.bf16 %v420, %v420
    %s423 = scalar_lea.vmem [#allocation4], 256
    %v424 = vld [vmem:[%s423] sm:$0xff]
    %v425 = vld [vmem:[%s423 + $0x8] sm:$0xff]
    %v426 = vld [vmem:[%s423 + $0x10] sm:$0xff]
    %v427 = vld [vmem:[%s423 + $0x18] sm:$0xff]
    %v428 = vld [vmem:[%s423 + $0x20] sm:$0xff]
    %v429 = vld [vmem:[%s423 + $0x28] sm:$0xff]
    %v430 = vld [vmem:[%s423 + $0x30] sm:$0xff]
    %v431 = vld [vmem:[%s423 + $0x38] sm:$0xff]
    %v432 = vld [vmem:[%s423 + $0x40] sm:$0xff]
    %v433 = vld [vmem:[%s423 + $0x48] sm:$0xff]
    %v434 = vld [vmem:[%s423 + $0x50] sm:$0xff]
    %v435 = vld [vmem:[%s423 + $0x58] sm:$0xff]
    %v436 = vld [vmem:[%s423 + $0x60] sm:$0xff]
    %v437 = vld [vmem:[%s423 + $0x68] sm:$0xff]
    %v438 = vld [vmem:[%s423 + $0x70] sm:$0xff]
    %v439 = vld [vmem:[%s423 + $0x78] sm:$0xff]
    %v440 = vld [vmem:[%s423 + $0x80] sm:$0xff]
    %v441 = vld [vmem:[%s423 + $0x88] sm:$0xff]
    %v442 = vld [vmem:[%s423 + $0x90] sm:$0xff]
    %v443 = vld [vmem:[%s423 + $0x98] sm:$0xff]
    %v444 = vld [vmem:[%s423 + $0xa0] sm:$0xff]
    %v445 = vld [vmem:[%s423 + $0xa8] sm:$0xff]
    %v446 = vld [vmem:[%s423 + $0xb0] sm:$0xff]
    %v447 = vld [vmem:[%s423 + $0xb8] sm:$0xff]
    %v448 = vld [vmem:[%s423 + $0xc0] sm:$0xff]
    %v449 = vld [vmem:[%s423 + $0xc8] sm:$0xff]
    %v450 = vld [vmem:[%s423 + $0xd0] sm:$0xff]
    %v451 = vld [vmem:[%s423 + $0xd8] sm:$0xff]
    %v452 = vld [vmem:[%s423 + $0xe0] sm:$0xff]
    %v453 = vld [vmem:[%s423 + $0xe8] sm:$0xff]
    %v454 = vld [vmem:[%s423 + $0xf0] sm:$0xff]
    %v455 = vld [vmem:[%s423 + $0xf8] sm:$0xff]
    %s456 = scalar_lea.vmem %s4, 2
    %v457 = vld [vmem:[%s456] ss:$4 sm:$0x3]
    %v459 = vlaneseq
    %v460 = vshrl.u32 %v459, 7
    %v461 = vsub.s32 0, %v460
    %v462 = vrot.slane %v457, %v461
    %v463 = vlaneseq
    %v464 = vshrl.u32 %v463, 7
    %v465 = vsub.s32 1, %v464
    %v466 = vrot.slane %v457, %v465
    %v501 = vunpack.c.l.b16 %v424
    %v502 = vunpack.c.h.b16 %v424
    %v503 = vunpack.c.l.b16 %v425
    %v504 = vunpack.c.h.b16 %v425
    %v505 = vunpack.c.l.b16 %v426
    %v506 = vunpack.c.h.b16 %v426
    %v507 = vunpack.c.l.b16 %v427
    %v508 = vunpack.c.h.b16 %v427
    %v509 = vunpack.c.l.b16 %v428
    %v510 = vunpack.c.h.b16 %v428
    %v511 = vunpack.c.l.b16 %v429
    %v512 = vunpack.c.h.b16 %v429
    %v513 = vunpack.c.l.b16 %v430
    %v514 = vunpack.c.h.b16 %v430
    %v515 = vunpack.c.l.b16 %v431
    %v516 = vunpack.c.h.b16 %v431
    %v517 = vunpack.c.l.b16 %v432
    %v518 = vunpack.c.h.b16 %v432
    %v519 = vunpack.c.l.b16 %v433
    %v520 = vunpack.c.h.b16 %v433
    %v521 = vunpack.c.l.b16 %v434
    %v522 = vunpack.c.h.b16 %v434
    %v523 = vunpack.c.l.b16 %v435
    %v524 = vunpack.c.h.b16 %v435
    %v525 = vunpack.c.l.b16 %v436
    %v526 = vunpack.c.h.b16 %v436
    %v527 = vunpack.c.l.b16 %v437
    %v528 = vunpack.c.h.b16 %v437
    %v529 = vunpack.c.l.b16 %v438
    %v530 = vunpack.c.h.b16 %v438
    %v531 = vunpack.c.l.b16 %v439
    %v532 = vunpack.c.h.b16 %v439
    %v533 = vunpack.c.l.b16 %v440
    %v534 = vunpack.c.h.b16 %v440
    %v535 = vunpack.c.l.b16 %v441
    %v536 = vunpack.c.h.b16 %v441
    %v537 = vunpack.c.l.b16 %v442
    %v538 = vunpack.c.h.b16 %v442
    %v539 = vunpack.c.l.b16 %v443
    %v540 = vunpack.c.h.b16 %v443
    %v541 = vunpack.c.l.b16 %v444
    %v542 = vunpack.c.h.b16 %v444
    %v543 = vunpack.c.l.b16 %v445
    %v544 = vunpack.c.h.b16 %v445
    %v545 = vunpack.c.l.b16 %v446
    %v546 = vunpack.c.h.b16 %v446
    %v547 = vunpack.c.l.b16 %v447
    %v548 = vunpack.c.h.b16 %v447
    %v549 = vunpack.c.l.b16 %v448
    %v550 = vunpack.c.h.b16 %v448
    %v551 = vunpack.c.l.b16 %v449
    %v552 = vunpack.c.h.b16 %v449
    %v553 = vunpack.c.l.b16 %v450
    %v554 = vunpack.c.h.b16 %v450
    %v555 = vunpack.c.l.b16 %v451
    %v556 = vunpack.c.h.b16 %v451
    %v557 = vunpack.c.l.b16 %v452
    %v558 = vunpack.c.h.b16 %v452
    %v559 = vunpack.c.l.b16 %v453
    %v560 = vunpack.c.h.b16 %v453
    %v561 = vunpack.c.l.b16 %v454
    %v562 = vunpack.c.h.b16 %v454
    %v563 = vunpack.c.l.b16 %v455
    %v564 = vunpack.c.h.b16 %v455
    %v565 = vpack.c.b16 %v503, %v501
    %v566 = vpack.c.b16 %v504, %v502
    %v567 = vpack.c.b16 %v507, %v505
    %v568 = vpack.c.b16 %v508, %v506
    %v569 = vpack.c.b16 %v511, %v509
    %v570 = vpack.c.b16 %v512, %v510
    %v571 = vpack.c.b16 %v515, %v513
    %v572 = vpack.c.b16 %v516, %v514
    %v573 = vpack.c.b16 %v519, %v517
    %v574 = vpack.c.b16 %v520, %v518
    %v575 = vpack.c.b16 %v523, %v521
    %v576 = vpack.c.b16 %v524, %v522
    %v577 = vpack.c.b16 %v527, %v525
    %v578 = vpack.c.b16 %v528, %v526
    %v579 = vpack.c.b16 %v531, %v529
    %v580 = vpack.c.b16 %v532, %v530
    %v581 = vpack.c.b16 %v535, %v533
    %v582 = vpack.c.b16 %v536, %v534
    %v583 = vpack.c.b16 %v539, %v537
    %v584 = vpack.c.b16 %v540, %v538
    %v585 = vpack.c.b16 %v543, %v541
    %v586 = vpack.c.b16 %v544, %v542
    %v587 = vpack.c.b16 %v547, %v545
    %v588 = vpack.c.b16 %v548, %v546
    %v589 = vpack.c.b16 %v551, %v549
    %v590 = vpack.c.b16 %v552, %v550
    %v591 = vpack.c.b16 %v555, %v553
    %v592 = vpack.c.b16 %v556, %v554
    %v593 = vpack.c.b16 %v559, %v557
    %v594 = vpack.c.b16 %v560, %v558
    %v595 = vpack.c.b16 %v563, %v561
    %v596 = vpack.c.b16 %v564, %v562
    %629 = vmatprep.subr.bf16.mxu0 %v566
    %630 = vmatpush1.bf16.msra.mxu0 %v565
    %631 = vmatprep.subr.bf16.mxu0 %v568
    %632 = vmatpush1.bf16.msra.mxu0 %v567
    %633 = vmatprep.subr.bf16.mxu0 %v570
    %634 = vmatpush1.bf16.msra.mxu0 %v569
    %635 = vmatprep.subr.bf16.mxu0 %v572
    %636 = vmatpush1.bf16.msra.mxu0 %v571
    %637 = vmatprep.subr.bf16.mxu0 %v574
    %638 = vmatpush1.bf16.msra.mxu0 %v573
    %639 = vmatprep.subr.bf16.mxu0 %v576
    %640 = vmatpush1.bf16.msra.mxu0 %v575
    %641 = vmatprep.subr.bf16.mxu0 %v578
    %642 = vmatpush1.bf16.msra.mxu0 %v577
    %643 = vmatprep.subr.bf16.mxu0 %v580
    %644 = vmatpush1.bf16.msra.mxu0 %v579
    %645 = vmatprep.subr.bf16.mxu0 %v582
    %646 = vmatpush1.bf16.msra.mxu0 %v581
    %647 = vmatprep.subr.bf16.mxu0 %v584
    %648 = vmatpush1.bf16.msra.mxu0 %v583
    %649 = vmatprep.subr.bf16.mxu0 %v586
    %650 = vmatpush1.bf16.msra.mxu0 %v585
    %651 = vmatprep.subr.bf16.mxu0 %v588
    %652 = vmatpush1.bf16.msra.mxu0 %v587
    %653 = vmatprep.subr.bf16.mxu0 %v590
    %654 = vmatpush1.bf16.msra.mxu0 %v589
    %655 = vmatprep.subr.bf16.mxu0 %v592
    %656 = vmatpush1.bf16.msra.mxu0 %v591
    %657 = vmatprep.subr.bf16.mxu0 %v594
    %658 = vmatpush1.bf16.msra.mxu0 %v593
    %659 = vmatprep.subr.bf16.mxu0 %v596
    %660 = vmatpush1.bf16.msra.mxu0 %v595
    %661 = vmatprep.mubr.bf16.mxu0 %v422
    %662 = vmatmul.mubr.bf16.gmra.mrb[0].mxu0 %v421
    %v663 = vpop.f32.mrb[0].mxu0
    %v664 = vadd.f32 %v462, %v663
    %v665 = vpop.f32.mrb[0].mxu0
    %v666 = vadd.f32 %v466, %v665
    %v667 = vpop.f32.mrb[0].mxu0
    %v668 = vpop.f32.mrb[0].mxu0
    %669 = vdwg.mxu0
    %v670 = vmax.f32 %v664, 0.0
    %v671 = vmax.f32 %v666, 0.0
    %v672 = vpack.c.bf16 %v670, %v670
    %v673 = vpack.c.bf16 %v671, %v671
    %v674 = vld [vmem:[#allocation6] sm:$0xf]
    %v675 = vld [vmem:[#allocation6 + $0x4] sm:$0xf]
    %v676 = vld [vmem:[#allocation6 + $0x8] sm:$0xf]
    %v677 = vld [vmem:[#allocation6 + $0xc] sm:$0xf]
    %v678 = vld [vmem:[#allocation6 + $0x10] sm:$0xf]
    %v679 = vld [vmem:[#allocation6 + $0x14] sm:$0xf]
    %v680 = vld [vmem:[#allocation6 + $0x18] sm:$0xf]
    %v681 = vld [vmem:[#allocation6 + $0x1c] sm:$0xf]
    %v682 = vld [vmem:[#allocation6 + $0x20] sm:$0xf]
    %v683 = vld [vmem:[#allocation6 + $0x24] sm:$0xf]
    %v684 = vld [vmem:[#allocation6 + $0x28] sm:$0xf]
    %v685 = vld [vmem:[#allocation6 + $0x2c] sm:$0xf]
    %v686 = vld [vmem:[#allocation6 + $0x30] sm:$0xf]
    %v687 = vld [vmem:[#allocation6 + $0x34] sm:$0xf]
    %v688 = vld [vmem:[#allocation6 + $0x38] sm:$0xf]
    %v689 = vld [vmem:[#allocation6 + $0x3c] sm:$0xf]
    %v690 = vld [vmem:[#allocation6 + $0x40] sm:$0xf]
    %v691 = vld [vmem:[#allocation6 + $0x44] sm:$0xf]
    %v692 = vld [vmem:[#allocation6 + $0x48] sm:$0xf]
    %v693 = vld [vmem:[#allocation6 + $0x4c] sm:$0xf]
    %v694 = vld [vmem:[#allocation6 + $0x50] sm:$0xf]
    %v695 = vld [vmem:[#allocation6 + $0x54] sm:$0xf]
    %v696 = vld [vmem:[#allocation6 + $0x58] sm:$0xf]
    %v697 = vld [vmem:[#allocation6 + $0x5c] sm:$0xf]
    %v698 = vld [vmem:[#allocation6 + $0x60] sm:$0xf]
    %v699 = vld [vmem:[#allocation6 + $0x64] sm:$0xf]
    %v700 = vld [vmem:[#allocation6 + $0x68] sm:$0xf]
    %v701 = vld [vmem:[#allocation6 + $0x6c] sm:$0xf]
    %v702 = vld [vmem:[#allocation6 + $0x70] sm:$0xf]
    %v703 = vld [vmem:[#allocation6 + $0x74] sm:$0xf]
    %v704 = vld [vmem:[#allocation6 + $0x78] sm:$0xf]
    %v705 = vld [vmem:[#allocation6 + $0x7c] sm:$0xf]
    %v706 = vld [vmem:[%s4 + $0x3] sm:$0x1]
    %v707 = vlaneseq
    %v708 = vshrl.u32 %v707, 7
    %v709 = vsub.s32 0, %v708
    %v710 = vrot.slane %v706, %v709
    %v743 = vunpack.c.l.b16 %v674
    %v744 = vunpack.c.l.b16 %v675
    %v745 = vunpack.c.l.b16 %v676
    %v746 = vunpack.c.l.b16 %v677
    %v747 = vunpack.c.l.b16 %v678
    %v748 = vunpack.c.l.b16 %v679
    %v749 = vunpack.c.l.b16 %v680
    %v750 = vunpack.c.l.b16 %v681
    %v751 = vunpack.c.l.b16 %v682
    %v752 = vunpack.c.l.b16 %v683
    %v753 = vunpack.c.l.b16 %v684
    %v754 = vunpack.c.l.b16 %v685
    %v755 = vunpack.c.l.b16 %v686
    %v756 = vunpack.c.l.b16 %v687
    %v757 = vunpack.c.l.b16 %v688
    %v758 = vunpack.c.l.b16 %v689
    %v759 = vunpack.c.l.b16 %v690
    %v760 = vunpack.c.l.b16 %v691
    %v761 = vunpack.c.l.b16 %v692
    %v762 = vunpack.c.l.b16 %v693
    %v763 = vunpack.c.l.b16 %v694
    %v764 = vunpack.c.l.b16 %v695
    %v765 = vunpack.c.l.b16 %v696
    %v766 = vunpack.c.l.b16 %v697
    %v767 = vunpack.c.l.b16 %v698
    %v768 = vunpack.c.l.b16 %v699
    %v769 = vunpack.c.l.b16 %v700
    %v770 = vunpack.c.l.b16 %v701
    %v771 = vunpack.c.l.b16 %v702
    %v772 = vunpack.c.l.b16 %v703
    %v773 = vunpack.c.l.b16 %v704
    %v774 = vunpack.c.l.b16 %v705
    %v775 = vpack.c.b16 %v744, %v743
    %v776 = vpack.c.b16 %v746, %v745
    %v777 = vpack.c.b16 %v748, %v747
    %v778 = vpack.c.b16 %v750, %v749
    %v779 = vpack.c.b16 %v752, %v751
    %v780 = vpack.c.b16 %v754, %v753
    %v781 = vpack.c.b16 %v756, %v755
    %v782 = vpack.c.b16 %v758, %v757
    %v783 = vpack.c.b16 %v760, %v759
    %v784 = vpack.c.b16 %v762, %v761
    %v785 = vpack.c.b16 %v764, %v763
    %v786 = vpack.c.b16 %v766, %v765
    %v787 = vpack.c.b16 %v768, %v767
    %v788 = vpack.c.b16 %v770, %v769
    %v789 = vpack.c.b16 %v772, %v771
    %v790 = vpack.c.b16 %v774, %v773
    %807 = vmatprep.subr.bf16.mxu0 0
    %808 = vmatpush1.bf16.msra.mxu0 %v775
    %809 = vmatprep.subr.bf16.mxu0 0
    %810 = vmatpush1.bf16.msra.mxu0 %v776
    %811 = vmatprep.subr.bf16.mxu0 0
    %812 = vmatpush1.bf16.msra.mxu0 %v777
    %813 = vmatprep.subr.bf16.mxu0 0
    %814 = vmatpush1.bf16.msra.mxu0 %v778
    %815 = vmatprep.subr.bf16.mxu0 0
    %816 = vmatpush1.bf16.msra.mxu0 %v779
    %817 = vmatprep.subr.bf16.mxu0 0
    %818 = vmatpush1.bf16.msra.mxu0 %v780
    %819 = vmatprep.subr.bf16.mxu0 0
    %820 = vmatpush1.bf16.msra.mxu0 %v781
    %821 = vmatprep.subr.bf16.mxu0 0
    %822 = vmatpush1.bf16.msra.mxu0 %v782
    %823 = vmatprep.subr.bf16.mxu0 0
    %824 = vmatpush1.bf16.msra.mxu0 %v783
    %825 = vmatprep.subr.bf16.mxu0 0
    %826 = vmatpush1.bf16.msra.mxu0 %v784
    %827 = vmatprep.subr.bf16.mxu0 0
    %828 = vmatpush1.bf16.msra.mxu0 %v785
    %829 = vmatprep.subr.bf16.mxu0 0
    %830 = vmatpush1.bf16.msra.mxu0 %v786
    %831 = vmatprep.subr.bf16.mxu0 0
    %832 = vmatpush1.bf16.msra.mxu0 %v787
    %833 = vmatprep.subr.bf16.mxu0 0
    %834 = vmatpush1.bf16.msra.mxu0 %v788
    %835 = vmatprep.subr.bf16.mxu0 0
    %836 = vmatpush1.bf16.msra.mxu0 %v789
    %837 = vmatprep.subr.bf16.mxu0 0
    %838 = vmatpush1.bf16.msra.mxu0 %v790
    %839 = vmatprep.mubr.bf16.mxu0 %v673
    %840 = vmatmul.mubr.bf16.gmra.mrb[0].mxu0 %v672
    %v841 = vpop.f32.mrb[0].mxu0
    %v842 = vadd.f32 %v710, %v841
    %v843 = vpop.f32.mrb[0].mxu0
    %v844 = vpop.f32.mrb[0].mxu0
    %v845 = vpop.f32.mrb[0].mxu0
    %846 = vdwg.mxu0
    %847 = vst [vmem:[%s5] sm:$0xff] %v842
    // Predicated region
    $region34: #{dueling_forward.1} parent=1 // pred_check
      _
    $region35: #{dueling_forward.1} parent=1 // pred_check_branch
      %849 = sbr.rel (0) target = $region37
    $region36: #{dueling_forward.1} parent=1 // pred_region
      _
    $region37: #{dueling_forward.1} parent=1 // pred_fallthru
      _
    // Predicated region
    $region38: #{dueling_forward.1} parent=1 // pred_check
      _
    $region39: #{dueling_forward.1} parent=1 // pred_check_branch
      %851 = sbr.rel (0) target = $region41
    $region40: #{dueling_forward.1} parent=1 // pred_region
      _
    $region41: #{dueling_forward.1} parent=1 // pred_fallthru
      _
    %852 = vsyncpa [#allocation3], 1
    %853 = vsyncpa [#allocation5], 1

</llo_original>
